<compile_context>
chip_gen: v7x
topology: tpu7x:2x2x1
jax: 0.10.0
libtpu: 0.0.40
codegen_flags: <defaults>
</compile_context>

<pallas_src>
import functools

import jax
import jax.numpy as jnp
from jax import lax
from jax.experimental import pallas as pl
from jax.experimental.pallas import tpu as pltpu


def _sds(start, size, stride):
    """Static (possibly strided) slice helper."""
    return pl.ds(start, size) if stride == 1 else pl.ds(start, size, stride)


def _min_value(dtype):
    dtype = jnp.dtype(dtype)
    if dtype == jnp.bool_:
        return False
    if jnp.issubdtype(dtype, jnp.floating):
        return float("-inf")
    return int(jnp.iinfo(dtype).min)


def _maxpool_kernel(x_ref, o_ref, *scratch, kernel_size, stride, padding,
                    h, w, ho, wo, nblk, init_val, dtype):
    """Max-pool a block of `nblk` planes, NCHW-native.

    x_ref : VMEM (nblk, H,  W )   input planes (W on lanes)
    o_ref : VMEM (nblk, Ho, Wo)   pooled output planes
    scratch:
      [xp_ref (nblk, H+2p, W+2p)]  (only when padding > 0) padded input copy
      t_ref   (nblk, W+2p, Ho)     pass-1 result, W moved to the sublane axis
    """
    if padding > 0:
        xp_ref, t_ref = scratch
        p = padding
        hp, wp = h + 2 * p, w + 2 * p
        # Initialize only the borders with the max-identity, then copy the
        # interior once — no full-slab init, no per-tap read-modify-write.
        xp_ref[:, 0:p, :] = jnp.full((nblk, p, wp), init_val, dtype)
        xp_ref[:, p + h:hp, :] = jnp.full((nblk, p, wp), init_val, dtype)
        xp_ref[:, :, 0:p] = jnp.full((nblk, hp, p), init_val, dtype)
        xp_ref[:, :, p + w:wp] = jnp.full((nblk, hp, p), init_val, dtype)
        xp_ref[:, p:p + h, p:p + w] = x_ref[...]
        src = xp_ref
    else:
        (t_ref,) = scratch
        wp = w
        src = x_ref

    # ---- Pass 1: pool along H -------------------------------------------
    # Every tap is a uniform strided slice on the second-minor axis; taps
    # accumulate in registers, single store of the (transposed) result.
    acc = src[:, _sds(0, ho, stride), :]                       # (nblk, Ho, Wp)
    for kh in range(1, kernel_size):
        acc = jnp.maximum(acc, src[:, _sds(kh, ho, stride), :])
    # Put W on the sublane axis for pass 2 (on-chip XLU minor-dim transpose).
    t_ref[...] = jnp.swapaxes(acc, 1, 2)                       # (nblk, Wp, Ho)

    # ---- Pass 2: pool along W (now second-minor) -------------------------
    acc = t_ref[:, _sds(0, wo, stride), :]                     # (nblk, Wo, Ho)
    for kw in range(1, kernel_size):
        acc = jnp.maximum(acc, t_ref[:, _sds(kw, wo, stride), :])
    o_ref[...] = jnp.swapaxes(acc, 1, 2)                       # (nblk, Ho, Wo)


def maxpool2d_pallas(x, kernel_size, stride=None, padding=0):
    """MaxPool2d forward, matching torch.nn.MaxPool2d / MaxPool2dFunction.forward."""
    if stride is None:
        stride = kernel_size
    if padding > kernel_size // 2:
        # PyTorch rejects this config (a window could be all padding).
        raise ValueError("padding must be at most half of kernel_size")

    b, c, h, w = x.shape
    ho = (h + 2 * padding - kernel_size) // stride + 1
    wo = (w + 2 * padding - kernel_size) // stride + 1
    if ho <= 0 or wo <= 0:
        raise ValueError("pooling output size must be positive")
    n = b * c
    hp, wp = h + 2 * padding, w + 2 * padding

    # Free reshape only — no HBM transpose.
    xr = x.reshape(n, h, w)

    itemsize = jnp.dtype(x.dtype).itemsize
    plane_in_bytes = itemsize * h * w
    plane_block_bytes = itemsize * (
        2 * h * w + 2 * ho * wo + wp * ho + (hp * wp if padding > 0 else 0))

    # Generation-aware VMEM budget; never claim more than 75% of physical
    # capacity (v7x has only 64 MiB per TensorCore).
    vmem_cap = 64 << 20
    try:
        vmem_cap = int(pltpu.get_tpu_info().vmem_capacity_bytes)
    except Exception:
        pass
    vmem_budget = (vmem_cap * 3) // 4
    block_budget = vmem_budget // 2            # half for blocks, half headroom

    nblk_fit = max(1, block_budget // plane_block_bytes)
    nblk_bw = max(1, (4 << 20) // plane_in_bytes)   # ~4 MiB input per step
    nblk_par = max(1, -(-n // 4))                   # aim for >= 4 grid steps
    nblk = int(max(1, min(nblk_fit, nblk_bw, nblk_par, n)))
    grid_n = pl.cdiv(n, nblk)
    # TODO(synk): add an H-band grid axis (with a kernel_size - stride row
    # halo) for feature maps so large that a single-plane block overflows
    # v7x VMEM, and evaluate pltpu.CORE_PARALLEL / pl.Buffered(3) there.

    vmem_limit = int(min(max(2 * nblk * plane_block_bytes, 16 << 20), vmem_budget))

    scratch = [pltpu.VMEM((nblk, wp, ho), x.dtype)]
    if padding > 0:
        scratch = [pltpu.VMEM((nblk, hp, wp), x.dtype)] + scratch

    kernel = functools.partial(
        _maxpool_kernel,
        kernel_size=kernel_size, stride=stride, padding=padding,
        h=h, w=w, ho=ho, wo=wo, nblk=nblk,
        init_val=_min_value(x.dtype), dtype=x.dtype)

    out = pl.pallas_call(
        kernel,
        out_shape=jax.ShapeDtypeStruct((n, ho, wo), x.dtype),
        grid_spec=pltpu.PrefetchScalarGridSpec(
            num_scalar_prefetch=0,
            grid=(grid_n,),
            in_specs=[pl.BlockSpec((nblk, h, w), lambda i: (i, 0, 0))],
            out_specs=pl.BlockSpec((nblk, ho, wo), lambda i: (i, 0, 0)),
            scratch_shapes=scratch,
        ),
        compiler_params=pltpu.CompilerParams(
            dimension_semantics=("parallel",),
            vmem_limit_bytes=vmem_limit,
        ),
    )(xr)

    # Free reshape back to NCHW.
    return out.reshape(b, c, ho, wo)


def maxpool2d_ref(x, kernel_size, stride=None, padding=0):
    """Pure-JAX reference (== torch.nn.functional.max_pool2d, float inputs)."""
    if stride is None:
        stride = kernel_size
    xp = jnp.pad(
        x,
        ((0, 0), (0, 0), (padding, padding), (padding, padding)),
        constant_values=-jnp.inf,
    )
    return lax.reduce_window(
        xp,
        -jnp.inf,
        lax.max,
        window_dimensions=(1, 1, kernel_size, kernel_size),
        window_strides=(1, 1, stride, stride),
        padding="VALID",
    )


if __name__ == "__main__":
    key = jax.random.PRNGKey(0)
    x = jax.random.normal(key, (2, 4, 16, 16), dtype=jnp.float32)  # NCHW

    # Config 1: MaxPool2d(kernel_size=3, stride=2, padding=1)
    out = maxpool2d_pallas(x, 3, 2, 1)
    out = jax.block_until_ready(out)
    ref = maxpool2d_ref(x, 3, 2, 1)
    assert out.shape == (2, 4, 8, 8), out.shape
    assert out.dtype == x.dtype
    assert jnp.allclose(out, ref), "mismatch vs reference (k=3,s=2,p=1)"

    # Config 2: MaxPool2d(kernel_size=2) (stride defaults to kernel_size, p=0)
    out2 = maxpool2d_pallas(x, 2)
    out2 = jax.block_until_ready(out2)
    ref2 = maxpool2d_ref(x, 2)
    assert out2.shape == (2, 4, 8, 8), out2.shape
    assert jnp.allclose(out2, ref2), "mismatch vs reference (k=2,s=2,p=0)"

    print("KERNEL_OK")
</pallas_src>

<mosaic_0001>
module attributes {stable_mosaic.version = 11 : i64} {
  func.func @_maxpool_kernel(%arg0: i32, %arg1: memref<2x16x16xf32, #tpu.memory_space<vmem>>, %arg2: memref<2x8x8xf32, #tpu.memory_space<vmem>>, %arg3: memref<2x18x18xf32, #tpu.memory_space<vmem>>, %arg4: memref<2x18x8xf32, #tpu.memory_space<vmem>>) attributes {dimension_semantics = [#tpu.dimension_semantics<parallel>], iteration_bounds = array<i64: 4>, scalar_prefetch = 0 : i64, scratch_operands = 2 : i64, tpu.core_type = #tpu.core_type<tc>, window_params = [{transform_indices = @transform_0, window_bounds = array<i64: 2, 16, 16>}, {transform_indices = @transform_1, window_bounds = array<i64: 2, 8, 8>}]} {
    %cst = arith.constant 0xFF800000 : f32
    %0 = vector.broadcast %cst : f32 to vector<2x1x18xf32>
    %c0 = arith.constant 0 : index
    %c0_0 = arith.constant 0 : index
    %c0_1 = arith.constant 0 : index
    %1 = vector.load %arg3[%c0, %c0_0, %c0_1] : memref<2x18x18xf32, #tpu.memory_space<vmem>>, vector<2x1x18xf32>
    tpu.vector_store %arg3[%c0, %c0_0, %c0_1], %0 {strides = array<i32>} : memref<2x18x18xf32, #tpu.memory_space<vmem>>, vector<2x1x18xf32>,
    %cst_2 = arith.constant 0xFF800000 : f32
    %2 = vector.broadcast %cst_2 : f32 to vector<2x1x18xf32>
    %c0_3 = arith.constant 0 : index
    %c17 = arith.constant 17 : index
    %c0_4 = arith.constant 0 : index
    %3 = vector.load %arg3[%c0_3, %c17, %c0_4] : memref<2x18x18xf32, #tpu.memory_space<vmem>>, vector<2x1x18xf32>
    tpu.vector_store %arg3[%c0_3, %c17, %c0_4], %2 {strides = array<i32>} : memref<2x18x18xf32, #tpu.memory_space<vmem>>, vector<2x1x18xf32>,
    %cst_5 = arith.constant 0xFF800000 : f32
    %4 = vector.broadcast %cst_5 : f32 to vector<2x18x1xf32>
    %c0_6 = arith.constant 0 : index
    %c0_7 = arith.constant 0 : index
    %c0_8 = arith.constant 0 : index
    %5 = vector.load %arg3[%c0_6, %c0_7, %c0_8] : memref<2x18x18xf32, #tpu.memory_space<vmem>>, vector<2x18x1xf32>
    tpu.vector_store %arg3[%c0_6, %c0_7, %c0_8], %4 {strides = array<i32>} : memref<2x18x18xf32, #tpu.memory_space<vmem>>, vector<2x18x1xf32>,
    %cst_9 = arith.constant 0xFF800000 : f32
    %6 = vector.broadcast %cst_9 : f32 to vector<2x18x1xf32>
    %c0_10 = arith.constant 0 : index
    %c0_11 = arith.constant 0 : index
    %c17_12 = arith.constant 17 : index
    %7 = vector.load %arg3[%c0_10, %c0_11, %c17_12] : memref<2x18x18xf32, #tpu.memory_space<vmem>>, vector<2x18x1xf32>
    tpu.vector_store %arg3[%c0_10, %c0_11, %c17_12], %6 {strides = array<i32>} : memref<2x18x18xf32, #tpu.memory_space<vmem>>, vector<2x18x1xf32>,
    %c0_13 = arith.constant 0 : index
    %c0_14 = arith.constant 0 : index
    %c0_15 = arith.constant 0 : index
    %8 = vector.load %arg1[%c0_13, %c0_14, %c0_15] : memref<2x16x16xf32, #tpu.memory_space<vmem>>, vector<2x16x16xf32>
    %c0_16 = arith.constant 0 : index
    %c1 = arith.constant 1 : index
    %c1_17 = arith.constant 1 : index
    %9 = vector.load %arg3[%c0_16, %c1, %c1_17] : memref<2x18x18xf32, #tpu.memory_space<vmem>>, vector<2x16x16xf32>
    tpu.vector_store %arg3[%c0_16, %c1, %c1_17], %8 {strides = array<i32>} : memref<2x18x18xf32, #tpu.memory_space<vmem>>, vector<2x16x16xf32>,
    %c0_18 = arith.constant 0 : index
    %c0_19 = arith.constant 0 : index
    %c0_20 = arith.constant 0 : index
    %10 = tpu.strided_load %arg3[%c0_18, %c0_19, %c0_20] {strides = array<i32: 1, 2, 1>} : memref<2x18x18xf32, #tpu.memory_space<vmem>>, vector<2x8x18xf32>
    %c0_21 = arith.constant 0 : index
    %c1_22 = arith.constant 1 : index
    %c0_23 = arith.constant 0 : index
    %11 = tpu.strided_load %arg3[%c0_21, %c1_22, %c0_23] {strides = array<i32: 1, 2, 1>} : memref<2x18x18xf32, #tpu.memory_space<vmem>>, vector<2x8x18xf32>
    %12 = arith.maximumf %10, %11 : vector<2x8x18xf32>
    %c0_24 = arith.constant 0 : index
    %c2 = arith.constant 2 : index
    %c0_25 = arith.constant 0 : index
    %13 = tpu.strided_load %arg3[%c0_24, %c2, %c0_25] {strides = array<i32: 1, 2, 1>} : memref<2x18x18xf32, #tpu.memory_space<vmem>>, vector<2x8x18xf32>
    %14 = arith.maximumf %12, %13 : vector<2x8x18xf32>
    %15 = tpu.transpose %14, [0, 2, 1] : vector<2x8x18xf32> -> vector<2x18x8xf32>
    %c0_26 = arith.constant 0 : index
    %c0_27 = arith.constant 0 : index
    %c0_28 = arith.constant 0 : index
    %16 = vector.load %arg4[%c0_26, %c0_27, %c0_28] : memref<2x18x8xf32, #tpu.memory_space<vmem>>, vector<2x18x8xf32>
    tpu.vector_store %arg4[%c0_26, %c0_27, %c0_28], %15 {strides = array<i32>} : memref<2x18x8xf32, #tpu.memory_space<vmem>>, vector<2x18x8xf32>,
    %c0_29 = arith.constant 0 : index
    %c0_30 = arith.constant 0 : index
    %c0_31 = arith.constant 0 : index
    %17 = tpu.strided_load %arg4[%c0_29, %c0_30, %c0_31] {strides = array<i32: 1, 2, 1>} : memref<2x18x8xf32, #tpu.memory_space<vmem>>, vector<2x8x8xf32>
    %c0_32 = arith.constant 0 : index
    %c1_33 = arith.constant 1 : index
    %c0_34 = arith.constant 0 : index
    %18 = tpu.strided_load %arg4[%c0_32, %c1_33, %c0_34] {strides = array<i32: 1, 2, 1>} : memref<2x18x8xf32, #tpu.memory_space<vmem>>, vector<2x8x8xf32>
    %19 = arith.maximumf %17, %18 : vector<2x8x8xf32>
    %c0_35 = arith.constant 0 : index
    %c2_36 = arith.constant 2 : index
    %c0_37 = arith.constant 0 : index
    %20 = tpu.strided_load %arg4[%c0_35, %c2_36, %c0_37] {strides = array<i32: 1, 2, 1>} : memref<2x18x8xf32, #tpu.memory_space<vmem>>, vector<2x8x8xf32>
    %21 = arith.maximumf %19, %20 : vector<2x8x8xf32>
    %22 = tpu.transpose %21, [0, 2, 1] : vector<2x8x8xf32> -> vector<2x8x8xf32>
    %c0_38 = arith.constant 0 : index
    %c0_39 = arith.constant 0 : index
    %c0_40 = arith.constant 0 : index
    %23 = vector.load %arg2[%c0_38, %c0_39, %c0_40] : memref<2x8x8xf32, #tpu.memory_space<vmem>>, vector<2x8x8xf32>
    tpu.vector_store %arg2[%c0_38, %c0_39, %c0_40], %22 {strides = array<i32>} : memref<2x8x8xf32, #tpu.memory_space<vmem>>, vector<2x8x8xf32>,
    return
  }
  func.func @transform_0(%arg0: i32) -> (i32, i32, i32) {
    %c0_i32 = arith.constant 0 : i32
    %c0_i32_0 = arith.constant 0 : i32
    %c0_i32_1 = arith.constant 0 : i32
    return %arg0, %c0_i32, %c0_i32_0 : i32, i32, i32
  }
  func.func @transform_1(%arg0: i32) -> (i32, i32, i32) {
    %c0_i32 = arith.constant 0 : i32
    %c0_i32_0 = arith.constant 0 : i32
    %c0_i32_1 = arith.constant 0 : i32
    return %arg0, %c0_i32, %c0_i32_0 : i32, i32, i32
  }
}

</mosaic_0001>

<llo_original>
// kernel: tpu_custom_call.1
$region0: #{tpu_custom_call.1}
  #allocation0 [shape = 'u32[]', space=smem, size = 0x4, offset = 0x4, fixed_abs, tag = 'smem constant byte address 0x4 - core index']
  #allocation1 [shape = 'u32[144,128]{1,0:T(1,128)}', space=vmem, size = 0x12000, scoped, tag = 'internal scratch']
  #allocation2 [shape = 'f32[2,18,18]{2,1,0:T(8,128)}', space=vmem, size = 0x6000, scoped, tag = 'scratch operand']
  #allocation3 [shape = 'f32[2,18,8]{2,1,0:T(8,128)}', space=vmem, size = 0x6000, scoped, tag = 'scratch operand']
  %s0 = inlined_call_operand.hbm [shape: f32[8,16,16], index: 0, kind: input, shape index: {}]
  %s1 = inlined_call_operand.hbm [shape: f32[8,8,8], index: 1, kind: output, shape index: {}]
  %s2 = sld [smem:[#allocation0]]
  $region41: #{tpu_custom_call.1} parent=0
    _
  %s4 = ssub.s32 1, %s2
  %s5 = scalar_select 0, %s4, %s2
  $region1: #{tpu_custom_call.1} parent=0
    #allocation4 [shape = 'u8[32768]{0}', space=vmem, size = 0x8000, scoped, tag = 'input window, operand 0']
    #allocation5 [shape = 's32[2]{0}', space=sflag, size = 0x8, scoped, tag = 'scoped memory for tpu_custom_call.1']
    #allocation6 [shape = 's32[2]{0}', space=sflag, size = 0x8, scoped, tag = 'scoped memory for tpu_custom_call.1']
    #allocation7 [shape = 'u8[16384]{0}', space=vmem, size = 0x4000, scoped, tag = 'output window, operand 0']
    %6 = vsyncpa [#allocation5], 0
    %s7 = scalar_lea.sflag [#allocation5], 1
    %8 = vsyncpa %s7, 0
    %9 = vsyncpa [#allocation6], 0
    %s10 = scalar_lea.sflag [#allocation6], 1
    %11 = vsyncpa %s10, 0
    loop: start=0, step=1, limit=6
    $region2: #{tpu_custom_call.1} parent=1 // loop_pre_header
      _
    $region3: #{tpu_custom_call.1} parent=1 // loop_header
      %s13 = sphi 0, %s17
      %p14 = scmp.ge.s32.totalorder %s13, 6
      %s23 = sphi 0, %s25
      %s26 = sphi 0, %s23
      %s27 = sphi 0, %s26
      %s43 = sphi 0, %s27
      %s49 = sphi 0, %s51
      %s52 = sphi 0, %s49
      %s53 = sphi 0, %s52
      %s69 = sphi 0, %s53
    $region4: #{tpu_custom_call.1} parent=1 // loop_header_branch
      %16 = sbr.rel (%p14) target = $region8
    $region5: #{tpu_custom_call.1} parent=1 // loop_body
      %s18 = ssub.s32 %s13, 1
      %s19 = ssub.s32 %s13, 2
      %s20 = sadd.s32 %s13, 1
      %s21 = ssub.s32 %s13, %s20
      %p22 = scmp.eq.s32.totalorder %s21, 0
      %s24 = sadd.s32 %s23, 1
      %s25 = scalar_select %p22, %s23, %s24
      %p28 = pneg %p22
      %p29 = scmp.eq.s32.totalorder %s13, 3
      %p30 = por %p28, %p29
      %p31 = scmp.ne.s32.totalorder %s23, %s26
      %p32 = scmp.eq.s32.totalorder %s13, 0
      %p33 = por %p31, %p32
      %p34 = scmp.ne.s32.totalorder %s23, %s26
      %p35 = scmp.eq.s32.totalorder %s18, 3
      %p36 = por %p34, %p35
      %p37 = scmp.ne.s32.totalorder %s26, %s27
      %p38 = scmp.eq.s32.totalorder %s18, 0
      %p39 = por %p37, %p38
      %p40 = scmp.ne.s32.totalorder %s26, %s27
      %p41 = scmp.eq.s32.totalorder %s19, 3
      %p42 = por %p40, %p41
      %p44 = scmp.ne.s32.totalorder %s27, %s43
      %p45 = scmp.eq.s32.totalorder %s19, 0
      %p46 = por %p44, %p45
      %s47 = ssub.s32 %s13, %s20
      %p48 = scmp.eq.s32.totalorder %s47, 0
      %s50 = sadd.s32 %s49, 1
      %s51 = scalar_select %p48, %s49, %s50
      %p54 = pneg %p48
      %p55 = scmp.eq.s32.totalorder %s13, 3
      %p56 = por %p54, %p55
      %p57 = scmp.ne.s32.totalorder %s49, %s52
      %p58 = scmp.eq.s32.totalorder %s13, 0
      %p59 = por %p57, %p58
      %p60 = scmp.ne.s32.totalorder %s49, %s52
      %p61 = scmp.eq.s32.totalorder %s18, 3
      %p62 = por %p60, %p61
      %p63 = scmp.ne.s32.totalorder %s52, %s53
      %p64 = scmp.eq.s32.totalorder %s18, 0
      %p65 = por %p63, %p64
      %p66 = scmp.ne.s32.totalorder %s52, %s53
      %p67 = scmp.eq.s32.totalorder %s19, 3
      %p68 = por %p66, %p67
      %p70 = scmp.ne.s32.totalorder %s53, %s69
      %p71 = scmp.eq.s32.totalorder %s19, 0
      %p72 = por %p70, %p71
      %p73 = scmp.le.s32.totalorder 1, %s13
      %p74 = scmp.lt.s32.totalorder %s13, 5
      %p75 = pnand %p73, %p74
      %p76 = pneg %p75
      // Predicated region
      $region9: #{tpu_custom_call.1} parent=5 // pred_check
        _
      $region10: #{tpu_custom_call.1} parent=5 // pred_check_branch
        %78 = sbr.rel (%p75) target = $region12
      $region11: #{tpu_custom_call.1} parent=5 // pred_region
        %s79 = ssub.s32 %s13, 1
      $region12: #{tpu_custom_call.1} parent=5 // pred_fallthru
        _
      %p80 = scmp.lt.s32.totalorder %s13, 4
      // Predicated region
      $region13: #{tpu_custom_call.1} parent=5 // pred_check
        %p81 = pneg %p80
      $region14: #{tpu_custom_call.1} parent=5 // pred_check_branch
        %83 = sbr.rel (%p81) target = $region16
      $region15: #{tpu_custom_call.1} parent=5 // pred_region
        // Predicated region
        $region17: #{tpu_custom_call.1} parent=15 // pred_check
          %p84 = pneg %p33
        $region18: #{tpu_custom_call.1} parent=15 // pred_check_branch
          %86 = sbr.rel (%p84) target = $region20
        $region19: #{tpu_custom_call.1} parent=15 // pred_region
          %s87 = sand.u32 %s23, 1
          %s88 = scalar_lea.sflag [#allocation5], %s87
          %s89 = sand.u32 %s23, 1
          %s90 = smul.addr %s89, 32
          %s91 = scalar_lea.vmem [#allocation4], %s90
          %s92 = smul.u32 2, %s13
          %s94 = ssub.s32 512, 512
          %95 = vsyncadd %s88, %s94
          %s96 = smul.addr %s92, 2
          %s97 = smul.addr %s96, 128
          %s98 = scalar_lea.hbm %s0, %s97
          %s99 = sshll.u32 %s91, 4
          %s100 = int_to_ptr.vmem [resolvable:$true] %s99
          %105 = dma.hbm_to_vmem [thread:$0]  %s98, 512, %s100, %s88, 128, 128, 8
        $region20: #{tpu_custom_call.1} parent=15 // pred_fallthru
          _
      $region16: #{tpu_custom_call.1} parent=5 // pred_fallthru
        _
      %p106 = scmp.le.s32.totalorder 1, %s13
      %p107 = scmp.lt.s32.totalorder %s13, 5
      %p108 = pnand %p106, %p107
      %p109 = pneg %p108
      // Predicated region
      $region21: #{tpu_custom_call.1} parent=5 // pred_check
        _
      $region22: #{tpu_custom_call.1} parent=5 // pred_check_branch
        %111 = sbr.rel (%p108) target = $region24
      $region23: #{tpu_custom_call.1} parent=5 // pred_region
        %s112 = ssub.s32 %s13, 1
        %s113 = sand.u32 %s26, 1
        %s114 = scalar_lea.sflag [#allocation5], %s113
        %s115 = sand.u32 %s26, 1
        %s116 = smul.addr %s115, 32
        %s117 = scalar_lea.vmem [#allocation4], %s116
        // Predicated region
        $region25: #{tpu_custom_call.1} parent=23 // pred_check
          %p118 = pneg %p39
        $region26: #{tpu_custom_call.1} parent=23 // pred_check_branch
          %120 = sbr.rel (%p118) target = $region28
        $region27: #{tpu_custom_call.1} parent=23 // pred_region
          %121 = dma.done %s114, 512
        $region28: #{tpu_custom_call.1} parent=23 // pred_fallthru
          _
        %s122 = sand.u32 %s26, 1
        %s123 = scalar_lea.sflag [#allocation5], %s122
        %s124 = sand.u32 %s26, 1
        %s125 = smul.addr %s124, 32
        %s126 = scalar_lea.vmem [#allocation4], %s125
        %p127 = pneg %p39
        %p128 = pneg %p36
        %p129 = pneg %p65
        %p130 = pneg %p62
        %s131 = sand.u32 %s52, 1
        %s132 = scalar_lea.sflag [#allocation6], %s131
        %s133 = sand.u32 %s52, 1
        %s134 = smul.addr %s133, 16
        %s135 = scalar_lea.vmem [#allocation7], %s134
        %s136 = smul.u32 2, %s18
        %s137 = smul.u32 2, %s18
        %vm138 = vcmask 139264
        %139 = vst.msk [vmem:[#allocation2] sm:$0x1] %vm138, -inf
        %140 = vst.msk [vmem:[#allocation2 + $0x18] sm:$0x1] %vm138, -inf
        %141 = vst.msk [vmem:[#allocation2 + $0x11] sm:$0x1] %vm138, -inf
        %142 = vst.msk [vmem:[#allocation2 + $0x29] sm:$0x1] %vm138, -inf
        %vm143 = vcmask 7168
        %144 = vst.msk [vmem:[#allocation2] sm:$0xff] %vm143, -inf
        %145 = vst.msk [vmem:[#allocation2 + $0x8] sm:$0xff] %vm143, -inf
        %vm146 = vcmask 1024
        %147 = vst.msk [vmem:[#allocation2 + $0x10] sm:$0x3] %vm146, -inf
        %148 = vst.msk [vmem:[#allocation2 + $0x18] sm:$0xff] %vm143, -inf
        %149 = vst.msk [vmem:[#allocation2 + $0x20] sm:$0xff] %vm143, -inf
        %150 = vst.msk [vmem:[#allocation2 + $0x28] sm:$0x3] %vm146, -inf
        %vm151 = vcmask 146568
        %152 = vst.msk [vmem:[#allocation2] sm:$0xff] %vm151, -inf
        %153 = vst.msk [vmem:[#allocation2 + $0x8] sm:$0xff] %vm151, -inf
        %vm154 = vcmask 140424
        %155 = vst.msk [vmem:[#allocation2 + $0x10] sm:$0x3] %vm154, -inf
        %156 = vst.msk [vmem:[#allocation2 + $0x18] sm:$0xff] %vm151, -inf
        %157 = vst.msk [vmem:[#allocation2 + $0x20] sm:$0xff] %vm151, -inf
        %158 = vst.msk [vmem:[#allocation2 + $0x28] sm:$0x3] %vm154, -inf
        %v159 = vld [vmem:[%s117] sm:$0xff]
        %v160 = vld [vmem:[%s117 + $0x8] sm:$0xff]
        %v161 = vld [vmem:[%s117 + $0x10] sm:$0xff]
        %v162 = vld [vmem:[%s117 + $0x18] sm:$0xff]
        %167 = vrot.lane.b32.xlu0 %v159, 1
        %v168 = vpop.permute.xlu0 %167
        %169 = vrot.lane.b32.xlu0 %v160, 1
        %v170 = vpop.permute.xlu0 %169
        %171 = vrot.lane.b32.xlu0 %v161, 1
        %v172 = vpop.permute.xlu0 %171
        %173 = vrot.lane.b32.xlu0 %v162, 1
        %v174 = vpop.permute.xlu0 %173
        %vm179 = vcmask 138248
        %180 = vst.msk [vmem:[#allocation2 + $0x1] sm:$0xff] %vm179, %v168
        %181 = vst.msk [vmem:[#allocation2 + $0x9] sm:$0xff] %vm179, %v170
        %182 = vst.msk [vmem:[#allocation2 + $0x19] sm:$0xff] %vm179, %v172
        %183 = vst.msk [vmem:[#allocation2 + $0x21] sm:$0xff] %vm179, %v174
        %v184 = vld [vmem:[#allocation2] ss:$2 sm:$0xff]
        %s185 = scalar_lea.vmem [#allocation2], 24
        %v186 = vld [vmem:[%s185] ss:$2 sm:$0xff]
        %s187 = scalar_lea.vmem [#allocation2], 1
        %v188 = vld [vmem:[%s187] ss:$2 sm:$0xff]
        %s189 = scalar_lea.vmem [#allocation2], 25
        %v190 = vld [vmem:[%s189] ss:$2 sm:$0xff]
        %v191 = vmax.f32 %v184, %v188
        %v192 = vmax.f32 %v186, %v190
        %s193 = scalar_lea.vmem [#allocation2], 2
        %v194 = vld [vmem:[%s193] ss:$2 sm:$0xff]
        %s195 = scalar_lea.vmem [#allocation2], 26
        %v196 = vld [vmem:[%s195] ss:$2 sm:$0xff]
        %v197 = vmax.f32 %v191, %v194
        %v198 = vmax.f32 %v192, %v196
        %199 = vxpose.xlu0.b32.start [1/16] %v197, 128
        %200 = vxpose.xlu0.b32.cont [2/16] 0.0, 128
        %201 = vxpose.xlu0.b32.cont [3/16] 0.0, 128
        %202 = vxpose.xlu0.b32.cont [4/16] 0.0, 128
        %203 = vxpose.xlu0.b32.cont [5/16] 0.0, 128
        %204 = vxpose.xlu0.b32.cont [6/16] 0.0, 128
        %205 = vxpose.xlu0.b32.cont [7/16] 0.0, 128
        %206 = vxpose.xlu0.b32.cont [8/16] 0.0, 128
        %207 = vxpose.xlu0.b32.cont [9/16] 0.0, 128
        %208 = vxpose.xlu0.b32.cont [10/16] 0.0, 128
        %209 = vxpose.xlu0.b32.cont [11/16] 0.0, 128
        %210 = vxpose.xlu0.b32.cont [12/16] 0.0, 128
        %211 = vxpose.xlu0.b32.cont [13/16] 0.0, 128
        %212 = vxpose.xlu0.b32.cont [14/16] 0.0, 128
        %213 = vxpose.xlu0.b32.cont [15/16] 0.0, 128
        %214 = vxpose.xlu0.b32.end [16/16] 0.0, 128
        %v215 = vpop.trf.xlu0
        %v216 = vpop.trf.xlu0
        %v217 = vpop.trf.xlu0
        %v218 = vpop.trf.xlu0
        %v219 = vpop.trf.xlu0
        %v220 = vpop.trf.xlu0
        %v221 = vpop.trf.xlu0
        %v222 = vpop.trf.xlu0
        %v223 = vpop.trf.xlu0
        %v224 = vpop.trf.xlu0
        %v225 = vpop.trf.xlu0
        %v226 = vpop.trf.xlu0
        %v227 = vpop.trf.xlu0
        %v228 = vpop.trf.xlu0
        %v229 = vpop.trf.xlu0
        %v230 = vpop.trf.xlu0
        %231 = vxpose.xlu0.b32.start [1/16] %v198, 128
        %232 = vxpose.xlu0.b32.cont [2/16] 0.0, 128
        %233 = vxpose.xlu0.b32.cont [3/16] 0.0, 128
        %234 = vxpose.xlu0.b32.cont [4/16] 0.0, 128
        %235 = vxpose.xlu0.b32.cont [5/16] 0.0, 128
        %236 = vxpose.xlu0.b32.cont [6/16] 0.0, 128
        %237 = vxpose.xlu0.b32.cont [7/16] 0.0, 128
        %238 = vxpose.xlu0.b32.cont [8/16] 0.0, 128
        %239 = vxpose.xlu0.b32.cont [9/16] 0.0, 128
        %240 = vxpose.xlu0.b32.cont [10/16] 0.0, 128
        %241 = vxpose.xlu0.b32.cont [11/16] 0.0, 128
        %242 = vxpose.xlu0.b32.cont [12/16] 0.0, 128
        %243 = vxpose.xlu0.b32.cont [13/16] 0.0, 128
        %244 = vxpose.xlu0.b32.cont [14/16] 0.0, 128
        %245 = vxpose.xlu0.b32.cont [15/16] 0.0, 128
        %246 = vxpose.xlu0.b32.end [16/16] 0.0, 128
        %v247 = vpop.trf.xlu0
        %v248 = vpop.trf.xlu0
        %v249 = vpop.trf.xlu0
        %v250 = vpop.trf.xlu0
        %v251 = vpop.trf.xlu0
        %v252 = vpop.trf.xlu0
        %v253 = vpop.trf.xlu0
        %v254 = vpop.trf.xlu0
        %v255 = vpop.trf.xlu0
        %v256 = vpop.trf.xlu0
        %v257 = vpop.trf.xlu0
        %v258 = vpop.trf.xlu0
        %v259 = vpop.trf.xlu0
        %v260 = vpop.trf.xlu0
        %v261 = vpop.trf.xlu0
        %v262 = vpop.trf.xlu0
        %vm263 = vcmask 64512
        %264 = vst.msk [vmem:[#allocation3] sm:$0xff] %vm263, %v215
        %265 = vst.msk [vmem:[#allocation3 + $0x8] sm:$0xff] %vm263, %v216
        %vm266 = vcmask 58368
        %267 = vst.msk [vmem:[#allocation3 + $0x10] sm:$0x3] %vm266, %v217
        %268 = vst.msk [vmem:[#allocation3 + $0x18] sm:$0xff] %vm263, %v247
        %269 = vst.msk [vmem:[#allocation3 + $0x20] sm:$0xff] %vm263, %v248
        %270 = vst.msk [vmem:[#allocation3 + $0x28] sm:$0x3] %vm266, %v249
        %v271 = vld [vmem:[#allocation3] ss:$2 sm:$0xff]
        %s272 = scalar_lea.vmem [#allocation3], 24
        %v273 = vld [vmem:[%s272] ss:$2 sm:$0xff]
        %s274 = scalar_lea.vmem [#allocation3], 1
        %v275 = vld [vmem:[%s274] ss:$2 sm:$0xff]
        %s276 = scalar_lea.vmem [#allocation3], 25
        %v277 = vld [vmem:[%s276] ss:$2 sm:$0xff]
        %v278 = vmax.f32 %v271, %v275
        %v279 = vmax.f32 %v273, %v277
        %s280 = scalar_lea.vmem [#allocation3], 2
        %v281 = vld [vmem:[%s280] ss:$2 sm:$0xff]
        %s282 = scalar_lea.vmem [#allocation3], 26
        %v283 = vld [vmem:[%s282] ss:$2 sm:$0xff]
        %v284 = vmax.f32 %v278, %v281
        %v285 = vmax.f32 %v279, %v283
        %286 = vxpose.xlu0.b32.start [1/16] %v284, 128
        %287 = vxpose.xlu0.b32.cont [2/16] 0.0, 128
        %288 = vxpose.xlu0.b32.cont [3/16] 0.0, 128
        %289 = vxpose.xlu0.b32.cont [4/16] 0.0, 128
        %290 = vxpose.xlu0.b32.cont [5/16] 0.0, 128
        %291 = vxpose.xlu0.b32.cont [6/16] 0.0, 128
        %292 = vxpose.xlu0.b32.cont [7/16] 0.0, 128
        %293 = vxpose.xlu0.b32.cont [8/16] 0.0, 128
        %294 = vxpose.xlu0.b32.cont [9/16] 0.0, 128
        %295 = vxpose.xlu0.b32.cont [10/16] 0.0, 128
        %296 = vxpose.xlu0.b32.cont [11/16] 0.0, 128
        %297 = vxpose.xlu0.b32.cont [12/16] 0.0, 128
        %298 = vxpose.xlu0.b32.cont [13/16] 0.0, 128
        %299 = vxpose.xlu0.b32.cont [14/16] 0.0, 128
        %300 = vxpose.xlu0.b32.cont [15/16] 0.0, 128
        %301 = vxpose.xlu0.b32.end [16/16] 0.0, 128
        %v302 = vpop.trf.xlu0
        %v303 = vpop.trf.xlu0
        %v304 = vpop.trf.xlu0
        %v305 = vpop.trf.xlu0
        %v306 = vpop.trf.xlu0
        %v307 = vpop.trf.xlu0
        %v308 = vpop.trf.xlu0
        %v309 = vpop.trf.xlu0
        %v310 = vpop.trf.xlu0
        %v311 = vpop.trf.xlu0
        %v312 = vpop.trf.xlu0
        %v313 = vpop.trf.xlu0
        %v314 = vpop.trf.xlu0
        %v315 = vpop.trf.xlu0
        %v316 = vpop.trf.xlu0
        %v317 = vpop.trf.xlu0
        %318 = vxpose.xlu0.b32.start [1/16] %v285, 128
        %319 = vxpose.xlu0.b32.cont [2/16] 0.0, 128
        %320 = vxpose.xlu0.b32.cont [3/16] 0.0, 128
        %321 = vxpose.xlu0.b32.cont [4/16] 0.0, 128
        %322 = vxpose.xlu0.b32.cont [5/16] 0.0, 128
        %323 = vxpose.xlu0.b32.cont [6/16] 0.0, 128
        %324 = vxpose.xlu0.b32.cont [7/16] 0.0, 128
        %325 = vxpose.xlu0.b32.cont [8/16] 0.0, 128
        %326 = vxpose.xlu0.b32.cont [9/16] 0.0, 128
        %327 = vxpose.xlu0.b32.cont [10/16] 0.0, 128
        %328 = vxpose.xlu0.b32.cont [11/16] 0.0, 128
        %329 = vxpose.xlu0.b32.cont [12/16] 0.0, 128
        %330 = vxpose.xlu0.b32.cont [13/16] 0.0, 128
        %331 = vxpose.xlu0.b32.cont [14/16] 0.0, 128
        %332 = vxpose.xlu0.b32.cont [15/16] 0.0, 128
        %333 = vxpose.xlu0.b32.end [16/16] 0.0, 128
        %v334 = vpop.trf.xlu0
        %v335 = vpop.trf.xlu0
        %v336 = vpop.trf.xlu0
        %v337 = vpop.trf.xlu0
        %v338 = vpop.trf.xlu0
        %v339 = vpop.trf.xlu0
        %v340 = vpop.trf.xlu0
        %v341 = vpop.trf.xlu0
        %v342 = vpop.trf.xlu0
        %v343 = vpop.trf.xlu0
        %v344 = vpop.trf.xlu0
        %v345 = vpop.trf.xlu0
        %v346 = vpop.trf.xlu0
        %v347 = vpop.trf.xlu0
        %v348 = vpop.trf.xlu0
        %v349 = vpop.trf.xlu0
        %350 = vst.msk [vmem:[%s135] sm:$0xff] %vm263, %v302
        %351 = vst.msk [vmem:[%s135 + $0x8] sm:$0xff] %vm263, %v334
        %s352 = sand.u32 %s52, 1
        %s353 = scalar_lea.sflag [#allocation6], %s352
        %s354 = sand.u32 %s52, 1
        %s355 = smul.addr %s354, 16
        %s356 = scalar_lea.vmem [#allocation7], %s355
        // Predicated region
        $region29: #{tpu_custom_call.1} parent=23 // pred_check
          %p357 = pneg %p62
        $region30: #{tpu_custom_call.1} parent=23 // pred_check_branch
          %359 = sbr.rel (%p357) target = $region32
        $region31: #{tpu_custom_call.1} parent=23 // pred_region
          %s360 = smul.u32 2, %s18
          %s362 = ssub.s32 256, 256
          %363 = vsyncadd %s353, %s362
          %s364 = smul.addr %s360, 128
          %s365 = scalar_lea.hbm %s1, %s364
          %s366 = sshll.u32 %s356, 4
          %s367 = int_to_ptr.vmem [resolvable:$true] %s366
          %372 = dma.vmem_to_hbm [thread:$0]  %s367, 256, %s365, %s353, 128, 128, 8
        $region32: #{tpu_custom_call.1} parent=23 // pred_fallthru
          _
      $region24: #{tpu_custom_call.1} parent=5 // pred_fallthru
        _
      %p373 = scmp.le.s32.totalorder 2, %s13
      // Predicated region
      $region33: #{tpu_custom_call.1} parent=5 // pred_check
        %p374 = pneg %p373
      $region34: #{tpu_custom_call.1} parent=5 // pred_check_branch
        %376 = sbr.rel (%p374) target = $region36
      $region35: #{tpu_custom_call.1} parent=5 // pred_region
        %s377 = ssub.s32 %s13, 2
        // Predicated region
        $region37: #{tpu_custom_call.1} parent=35 // pred_check
          %p378 = pneg %p68
        $region38: #{tpu_custom_call.1} parent=35 // pred_check_branch
          %380 = sbr.rel (%p378) target = $region40
        $region39: #{tpu_custom_call.1} parent=35 // pred_region
          %s381 = sand.u32 %s53, 1
          %s382 = scalar_lea.sflag [#allocation6], %s381
          %s383 = sand.u32 %s53, 1
          %s384 = smul.addr %s383, 16
          %s385 = scalar_lea.vmem [#allocation7], %s384
          %386 = dma.done %s382, 256
        $region40: #{tpu_custom_call.1} parent=35 // pred_fallthru
          _
      $region36: #{tpu_custom_call.1} parent=5 // pred_fallthru
        _
    $region6: #{tpu_custom_call.1} parent=1 // loop_footer
      %s17 = sadd.s32 1, %s13
    $region7: #{tpu_custom_call.1} parent=1 // loop_footer_branch
      %12 = sbr.rel target = $region3
    $region8: #{tpu_custom_call.1} parent=1 // loop_exit
      _
    %387 = vsyncpa [#allocation5], 1
    %s388 = scalar_lea.sflag [#allocation5], 1
    %389 = vsyncpa %s388, 1
    %390 = vsyncpa [#allocation6], 1
    %s391 = scalar_lea.sflag [#allocation6], 1
    %392 = vsyncpa %s391, 1

</llo_original>
